<compile_context>
chip_gen: v7x
topology: tpu7x:2x2x1
jax: 0.10.0
libtpu: 0.0.40
codegen_flags: <defaults>
</compile_context>

<pallas_src>
import functools

import jax
import jax.numpy as jnp
from jax.experimental import pallas as pl
from jax.experimental.pallas import tpu as pltpu


def _round_up(x, m):
    return (x + m - 1) // m * m


def _cdiv(a, b):
    return -(-a // b)


def _simclr_kernel(sim_ref, lab_ref, pos_ref, tot_ref, *, strip, n_strips):
    # Grid = (core, row_block, col_block).  Init keys off only the non-core
    # axes, so each core zeroes its own resident accumulator block.
    i = pl.program_id(1)
    j = pl.program_id(2)

    @pl.when((i == 0) & (j == 0))
    def _():
        pos_ref[...] = jnp.zeros_like(pos_ref)
        tot_ref[...] = jnp.zeros_like(tot_ref)

    cols = sim_ref.shape[1]

    def strip_body(k):
        r0 = pl.multiple_of(k * strip, strip)
        s = sim_ref[pl.ds(r0, strip), :]                 # (strip, cols) f32
        l = lab_ref[pl.ds(r0, strip), :]                 # (strip, cols) int8
        e = jnp.exp(7.0 * s)                             # EUP transcendental
        ep = jnp.where(l != 0, e, 0.0)                   # masked positives
        # Reduce sublane-groups only (vreg-to-vreg VPU adds).  The single
        # cross-lane/cross-sublane reduction happens once, in the wrapper.
        tot_ref[0] += jnp.sum(e.reshape(strip // 8, 8, cols), axis=0)
        pos_ref[0] += jnp.sum(ep.reshape(strip // 8, 8, cols), axis=0)

    if n_strips == 1:
        strip_body(0)
    else:
        pl.loop(0, n_strips)(strip_body)


def simclr_loss(sim, label, *,
                vmem_stream_budget_bytes=24 * 1024 * 1024,
                max_col_tile=4096):
    """Pallas implementation of SimCLRLoss.forward (full-sum reduction -> scalar).

    vmem_stream_budget_bytes bounds only the double-buffered input streams;
    strip-sized intermediates (~<=8 MiB) and the accumulator blocks are on top.
    The conservative default keeps total VMEM < ~35 MiB, safe on v7x (64 MiB);
    on v6e (128 MiB) it can be raised to ~48 MiB for a few % more.
    """
    N, M = sim.shape
    assert label.shape == (N, M)

    sim = sim.astype(jnp.float32)
    # SimCLR labels are a {0,1} positive-pair mask: int8 is exact and cuts the
    # label stream to 1 B/elem on this bandwidth-bound kernel.
    label = (label != 0).astype(jnp.int8)

    SIM_BYTES, LAB_BYTES = 4, 1
    ROW_ALIGN = 32          # int8 sublane packing
    STRIP = 128             # in-kernel strip rows (multiple of ROW_ALIGN)

    # ---- lane-dense column tiling --------------------------------------------
    col_tile = min(_round_up(M, 128), max_col_tile)
    n_col = _cdiv(M, col_tile)
    col_tile = _round_up(_cdiv(M, n_col), 128)      # rebalance to cut padding
    Mp = n_col * col_tile

    # ---- row tiling from the double-buffered stream budget --------------------
    per_row_stream = (SIM_BYTES + LAB_BYTES) * col_tile * 2
    max_rows = max(ROW_ALIGN, vmem_stream_budget_bytes // per_row_stream)
    row_tile = min(max_rows, _round_up(N, ROW_ALIGN))
    if row_tile >= STRIP:
        row_tile = row_tile // STRIP * STRIP        # whole strips per tile
        strip = STRIP
    else:
        row_tile = _round_up(row_tile, ROW_ALIGN)
        strip = row_tile                            # single strip
    n_strips = row_tile // strip

    # ---- split the row blocks across the (up to) 2 TensorCores ----------------
    n_row_per_core = max(1, _cdiv(_cdiv(N, row_tile), 2))
    Np = 2 * n_row_per_core * row_tile

    # ---- pad ragged edges so padded elements contribute exactly 0 -------------
    if (Np, Mp) != (N, M):
        # exp(7 * -1e4) underflows to exactly 0.0 in f32 (keep the sim stream
        # f32; a bf16 sim cast would need this constant revisited).
        sim = jnp.pad(sim, ((0, Np - N), (0, Mp - M)), constant_values=-1e4)
        label = jnp.pad(label, ((0, Np - N), (0, Mp - M)), constant_values=0)

    kernel = functools.partial(_simclr_kernel, strip=strip, n_strips=n_strips)

    cost = pl.CostEstimate(
        flops=3 * Np * Mp,
        transcendentals=Np * Mp,
        bytes_accessed=Np * Mp * (SIM_BYTES + LAB_BYTES) + 2 * 2 * 8 * col_tile * 4,
    )

    pos_part, tot_part = pl.pallas_call(
        kernel,
        out_shape=(
            jax.ShapeDtypeStruct((2, 8, col_tile), jnp.float32),   # per-core pos
            jax.ShapeDtypeStruct((2, 8, col_tile), jnp.float32),   # per-core tot
        ),
        grid_spec=pltpu.PrefetchScalarGridSpec(
            num_scalar_prefetch=0,
            grid=(2, n_row_per_core, n_col),
            in_specs=[
                pl.BlockSpec((row_tile, col_tile),
                             lambda c, i, j: (c * n_row_per_core + i, j)),
                pl.BlockSpec((row_tile, col_tile),
                             lambda c, i, j: (c * n_row_per_core + i, j)),
            ],
            out_specs=[
                # Indexed by the core axis only -> VMEM-resident per-core
                # accumulator blocks; each core writes a distinct block.
                pl.BlockSpec((1, 8, col_tile), lambda c, i, j: (c, 0, 0)),
                pl.BlockSpec((1, 8, col_tile), lambda c, i, j: (c, 0, 0)),
            ],
        ),
        compiler_params=pltpu.CompilerParams(
            # Core axis is independent work (per-core outputs) -> parallel so
            # v7x megacore shards it; row/col feed a resident accumulator ->
            # arbitrary.
            dimension_semantics=("parallel", "arbitrary", "arbitrary"),
            # Streams (<=~24 MiB) + one strip of f32 temps (<=~8 MiB) +
            # accumulators: comfortable headroom on v7x's 64 MiB VMEM.
            vmem_limit_bytes=48 * 1024 * 1024,
        ),
        cost_estimate=cost,
    )(sim, label)

    # Single tiny cross-lane / cross-core reduction + the -log, in plain XLA.
    pos = jnp.sum(pos_part)
    tot = jnp.sum(tot_part)
    return -jnp.log(pos / (tot - pos + 1e-8))


def _reference(sim, label):
    e = jnp.exp(7.0 * sim.astype(jnp.float32))
    pos = jnp.sum(e * label.astype(jnp.float32))
    return -jnp.log(pos / (jnp.sum(e) - pos + 1e-8))


if __name__ == "__main__":
    key = jax.random.PRNGKey(0)
    k1, k2, k3, k4, k5, k6 = jax.random.split(key, 6)

    # Case 1: small lane-aligned shape (module consumes a dense sim matrix).
    N, M = 16, 128
    sim = jax.random.uniform(k1, (N, M), jnp.float32, minval=-1.0, maxval=1.0)
    label = (jax.random.uniform(k2, (N, M)) > 0.9).astype(jnp.float32)
    label = label.at[0, 0].set(1.0)   # ensure at least one positive pair
    loss = jax.block_until_ready(simclr_loss(sim, label))
    ref = _reference(sim, label)
    assert jnp.allclose(loss, ref, rtol=1e-5, atol=1e-5), (loss, ref)

    # Case 2: ragged shape exercising padding + the multi-strip row loop.
    N2, M2 = 300, 200
    sim2 = jax.random.uniform(k3, (N2, M2), jnp.float32, minval=-1.0, maxval=1.0)
    label2 = (jax.random.uniform(k4, (N2, M2)) > 0.9).astype(jnp.float32)
    label2 = label2.at[0, 0].set(1.0)
    loss2 = jax.block_until_ready(simclr_loss(sim2, label2))
    ref2 = _reference(sim2, label2)
    assert jnp.allclose(loss2, ref2, rtol=1e-4, atol=1e-6), (loss2, ref2)

    # Case 3: small shape forced onto a multi-block grid (n_col > 1 and
    # n_row_per_core > 1) to exercise the accumulate-across-grid paths.
    N3, M3 = 100, 384
    sim3 = jax.random.uniform(k5, (N3, M3), jnp.float32, minval=-1.0, maxval=1.0)
    label3 = (jax.random.uniform(k6, (N3, M3)) > 0.9).astype(jnp.float32)
    label3 = label3.at[0, 0].set(1.0)
    loss3 = jax.block_until_ready(
        simclr_loss(sim3, label3,
                    vmem_stream_budget_bytes=32 * 1024,   # force tiny row tiles
                    max_col_tile=128))
    ref3 = _reference(sim3, label3)
    assert jnp.allclose(loss3, ref3, rtol=1e-4, atol=1e-6), (loss3, ref3)

    print("KERNEL_OK")
</pallas_src>

<mosaic_0001>
module attributes {stable_mosaic.version = 11 : i64} {
  func.func @_simclr_kernel(%arg0: i32, %arg1: i32, %arg2: i32, %arg3: memref<32x128xf32, #tpu.memory_space<vmem>>, %arg4: memref<32x128xi8, #tpu.memory_space<vmem>>, %arg5: memref<1x8x128xf32, #tpu.memory_space<vmem>>, %arg6: memref<1x8x128xf32, #tpu.memory_space<vmem>>) attributes {dimension_semantics = [#tpu.dimension_semantics<parallel>, #tpu.dimension_semantics<arbitrary>, #tpu.dimension_semantics<arbitrary>], iteration_bounds = array<i64: 2, 1, 1>, scalar_prefetch = 0 : i64, scratch_operands = 0 : i64, tpu.core_type = #tpu.core_type<tc>, window_params = [{transform_indices = @transform_0, window_bounds = array<i64: 32, 128>}, {transform_indices = @transform_1, window_bounds = array<i64: 32, 128>}, {transform_indices = @transform_2, window_bounds = array<i64: 1, 8, 128>}, {transform_indices = @transform_3, window_bounds = array<i64: 1, 8, 128>}]} {
    %c0_i32 = arith.constant 0 : i32
    %0 = arith.cmpi eq, %arg1, %c0_i32 : i32
    %c0_i32_0 = arith.constant 0 : i32
    %1 = arith.cmpi eq, %arg2, %c0_i32_0 : i32
    %2 = arith.andi %0, %1 : i1
    %3 = arith.extui %2 : i1 to i32
    %c0_i32_1 = arith.constant 0 : i32
    %4 = arith.cmpi ne, %3, %c0_i32_1 : i32
    scf.if %4 {
      %cst_19 = arith.constant 0.000000e+00 : f32
      %33 = vector.broadcast %cst_19 : f32 to vector<1x8x128xf32>
      %c0_20 = arith.constant 0 : index
      %c0_21 = arith.constant 0 : index
      %c0_22 = arith.constant 0 : index
      %34 = vector.load %arg5[%c0_20, %c0_21, %c0_22] : memref<1x8x128xf32, #tpu.memory_space<vmem>>, vector<1x8x128xf32>
      tpu.vector_store %arg5[%c0_20, %c0_21, %c0_22], %33 {strides = array<i32>} : memref<1x8x128xf32, #tpu.memory_space<vmem>>, vector<1x8x128xf32>,
      %cst_23 = arith.constant 0.000000e+00 : f32
      %35 = vector.broadcast %cst_23 : f32 to vector<1x8x128xf32>
      %c0_24 = arith.constant 0 : index
      %c0_25 = arith.constant 0 : index
      %c0_26 = arith.constant 0 : index
      %36 = vector.load %arg6[%c0_24, %c0_25, %c0_26] : memref<1x8x128xf32, #tpu.memory_space<vmem>>, vector<1x8x128xf32>
      tpu.vector_store %arg6[%c0_24, %c0_25, %c0_26], %35 {strides = array<i32>} : memref<1x8x128xf32, #tpu.memory_space<vmem>>, vector<1x8x128xf32>,
    } else {
    }
    %c0_i32_2 = arith.constant 0 : i32
    %5 = tpu.assume_multiple %c0_i32_2, 32 : i32
    %6 = arith.index_cast %5 : i32 to index
    %c0 = arith.constant 0 : index
    %7 = vector.load %arg3[%6, %c0] : memref<32x128xf32, #tpu.memory_space<vmem>>, vector<32x128xf32>
    %8 = arith.index_cast %5 : i32 to index
    %c0_3 = arith.constant 0 : index
    %9 = vector.load %arg4[%8, %c0_3] : memref<32x128xi8, #tpu.memory_space<vmem>>, vector<32x128xi8>
    %cst = arith.constant 7.000000e+00 : f32
    %10 = vector.broadcast %cst : f32 to vector<32x128xf32>
    %11 = arith.mulf %10, %7 : vector<32x128xf32>
    %12 = math.exp %11 : vector<32x128xf32>
    %c0_i8 = arith.constant 0 : i8
    %13 = vector.broadcast %c0_i8 : i8 to vector<32x128xi8>
    %14 = arith.cmpi ne, %9, %13 : vector<32x128xi8>
    %cst_4 = arith.constant 0.000000e+00 : f32
    %15 = vector.broadcast %cst_4 : f32 to vector<32x128xf32>
    %16 = arith.select %14, %12, %15 : vector<32x128xi1>, vector<32x128xf32>
    %c0_5 = arith.constant 0 : index
    %c0_6 = arith.constant 0 : index
    %c0_7 = arith.constant 0 : index
    %17 = vector.load %arg6[%c0_5, %c0_6, %c0_7] : memref<1x8x128xf32, #tpu.memory_space<vmem>>, vector<1x8x128xf32>
    %18 = vector.shape_cast %17 : vector<1x8x128xf32> to vector<8x128xf32>
    %19 = vector.shape_cast %12 : vector<32x128xf32> to vector<4x8x128xf32>
    %cst_8 = arith.constant dense<0.000000e+00> : vector<8x128xf32>
    %20 = vector.multi_reduction <add>, %19, %cst_8 [0] : vector<4x8x128xf32> to vector<8x128xf32>
    %21 = arith.addf %18, %20 : vector<8x128xf32>
    %c0_9 = arith.constant 0 : index
    %c0_10 = arith.constant 0 : index
    %c0_11 = arith.constant 0 : index
    %22 = vector.load %arg6[%c0_9, %c0_10, %c0_11] : memref<1x8x128xf32, #tpu.memory_space<vmem>>, vector<1x8x128xf32>
    %23 = vector.shape_cast %22 : vector<1x8x128xf32> to vector<8x128xf32>
    %24 = vector.shape_cast %21 : vector<8x128xf32> to vector<1x8x128xf32>
    tpu.vector_store %arg6[%c0_9, %c0_10, %c0_11], %24 {strides = array<i32>} : memref<1x8x128xf32, #tpu.memory_space<vmem>>, vector<1x8x128xf32>,
    %c0_12 = arith.constant 0 : index
    %c0_13 = arith.constant 0 : index
    %c0_14 = arith.constant 0 : index
    %25 = vector.load %arg5[%c0_12, %c0_13, %c0_14] : memref<1x8x128xf32, #tpu.memory_space<vmem>>, vector<1x8x128xf32>
    %26 = vector.shape_cast %25 : vector<1x8x128xf32> to vector<8x128xf32>
    %27 = vector.shape_cast %16 : vector<32x128xf32> to vector<4x8x128xf32>
    %cst_15 = arith.constant dense<0.000000e+00> : vector<8x128xf32>
    %28 = vector.multi_reduction <add>, %27, %cst_15 [0] : vector<4x8x128xf32> to vector<8x128xf32>
    %29 = arith.addf %26, %28 : vector<8x128xf32>
    %c0_16 = arith.constant 0 : index
    %c0_17 = arith.constant 0 : index
    %c0_18 = arith.constant 0 : index
    %30 = vector.load %arg5[%c0_16, %c0_17, %c0_18] : memref<1x8x128xf32, #tpu.memory_space<vmem>>, vector<1x8x128xf32>
    %31 = vector.shape_cast %30 : vector<1x8x128xf32> to vector<8x128xf32>
    %32 = vector.shape_cast %29 : vector<8x128xf32> to vector<1x8x128xf32>
    tpu.vector_store %arg5[%c0_16, %c0_17, %c0_18], %32 {strides = array<i32>} : memref<1x8x128xf32, #tpu.memory_space<vmem>>, vector<1x8x128xf32>,
    return
  }
  func.func @transform_0(%arg0: i32, %arg1: i32, %arg2: i32) -> (i32, i32) {
    %c1_i32 = arith.constant 1 : i32
    %0 = arith.muli %arg0, %c1_i32 : i32
    %1 = arith.addi %0, %arg1 : i32
    %c0_i32 = arith.constant 0 : i32
    return %1, %arg2 : i32, i32
  }
  func.func @transform_1(%arg0: i32, %arg1: i32, %arg2: i32) -> (i32, i32) {
    %c1_i32 = arith.constant 1 : i32
    %0 = arith.muli %arg0, %c1_i32 : i32
    %1 = arith.addi %0, %arg1 : i32
    %c0_i32 = arith.constant 0 : i32
    return %1, %arg2 : i32, i32
  }
  func.func @transform_2(%arg0: i32, %arg1: i32, %arg2: i32) -> (i32, i32, i32) {
    %c0_i32 = arith.constant 0 : i32
    %c0_i32_0 = arith.constant 0 : i32
    %c0_i32_1 = arith.constant 0 : i32
    return %arg0, %c0_i32, %c0_i32_0 : i32, i32, i32
  }
  func.func @transform_3(%arg0: i32, %arg1: i32, %arg2: i32) -> (i32, i32, i32) {
    %c0_i32 = arith.constant 0 : i32
    %c0_i32_0 = arith.constant 0 : i32
    %c0_i32_1 = arith.constant 0 : i32
    return %arg0, %c0_i32, %c0_i32_0 : i32, i32, i32
  }
}

</mosaic_0001>

<llo_original>
// kernel: tpu_custom_call.1
$region0: #{tpu_custom_call.1}
  #allocation0 [shape = 'u32[]', space=smem, size = 0x4, offset = 0x4, fixed_abs, tag = 'smem constant byte address 0x4 - core index']
  #allocation1 [shape = 'u32[144,128]{1,0:T(1,128)}', space=vmem, size = 0x12000, scoped, tag = 'internal scratch']
  %s0 = inlined_call_operand.hbm [shape: f32[64,128], index: 0, kind: input, shape index: {}]
  %s1 = inlined_call_operand.hbm [shape: s8[64,128], index: 1, kind: input, shape index: {}]
  %s2 = inlined_call_operand.hbm [shape: f32[2,8,128], index: 2, kind: output, shape index: {0}]
  %s3 = inlined_call_operand.hbm [shape: f32[2,8,128], index: 3, kind: output, shape index: {1}]
  %4 = xla_tuple %s2, %s3
  %s5 = sld [smem:[#allocation0]]
  $region61: #{tpu_custom_call.1} parent=0
    _
  %s7 = ssub.s32 1, %s5
  %s8 = scalar_select 0, %s7, %s5
  $region1: #{tpu_custom_call.1} parent=0
    #allocation2 [shape = 'u8[32768]{0}', space=vmem, size = 0x8000, scoped, tag = 'input window, operand 0']
    #allocation3 [shape = 's32[2]{0}', space=sflag, size = 0x8, scoped, tag = 'scoped memory for tpu_custom_call.1']
    #allocation4 [shape = 's32[2]{0}', space=sflag, size = 0x8, scoped, tag = 'scoped memory for tpu_custom_call.1']
    #allocation5 [shape = 'u8[8192]{0}', space=vmem, size = 0x2000, scoped, tag = 'input window, operand 1']
    #allocation6 [shape = 's32[2]{0}', space=sflag, size = 0x8, scoped, tag = 'scoped memory for tpu_custom_call.1']
    #allocation7 [shape = 'u8[8192]{0}', space=vmem, size = 0x2000, scoped, tag = 'output window, operand 0']
    #allocation8 [shape = 'u8[8192]{0}', space=vmem, size = 0x2000, scoped, tag = 'output window, operand 1']
    #allocation9 [shape = 's32[2]{0}', space=sflag, size = 0x8, scoped, tag = 'scoped memory for tpu_custom_call.1']
    %9 = vsyncpa [#allocation3], 0
    %s10 = scalar_lea.sflag [#allocation3], 1
    %11 = vsyncpa %s10, 0
    %12 = vsyncpa [#allocation6], 0
    %s13 = scalar_lea.sflag [#allocation6], 1
    %14 = vsyncpa %s13, 0
    %15 = vsyncpa [#allocation4], 0
    %s16 = scalar_lea.sflag [#allocation4], 1
    %17 = vsyncpa %s16, 0
    %18 = vsyncpa [#allocation9], 0
    %s19 = scalar_lea.sflag [#allocation9], 1
    %20 = vsyncpa %s19, 0
    loop: start=0, step=1, limit=4
    $region2: #{tpu_custom_call.1} parent=1 // loop_pre_header
      _
    $region3: #{tpu_custom_call.1} parent=1 // loop_header
      %s22 = sphi 0, %s26
      %p23 = scmp.ge.s32.totalorder %s22, 4
      %s29 = sphi 0, %s48
      %s30 = sphi 0, %s44
      %s31 = sphi 0, %s40
      %s32 = sphi 0, %s29
      %s33 = sphi 0, %s30
      %s34 = sphi 0, %s31
      %s35 = sphi 0, %s32
      %s36 = sphi 0, %s33
      %s37 = sphi 0, %s34
      %s55 = sphi 0, %s57
      %s58 = sphi 0, %s55
      %s59 = sphi 0, %s58
      %s75 = sphi 0, %s59
      %s85 = sphi 0, %s87
      %s88 = sphi 0, %s85
      %s89 = sphi 0, %s88
      %s105 = sphi 0, %s89
      %s111 = sphi 0, %s113
      %s114 = sphi 0, %s111
      %s115 = sphi 0, %s114
      %s131 = sphi 0, %s115
      %s137 = sphi 0, %s139
      %s140 = sphi 0, %s137
      %s141 = sphi 0, %s140
      %s157 = sphi 0, %s141
    $region4: #{tpu_custom_call.1} parent=1 // loop_header_branch
      %25 = sbr.rel (%p23) target = $region8
    $region5: #{tpu_custom_call.1} parent=1 // loop_body
      %s27 = ssub.s32 %s22, 1
      %s28 = ssub.s32 %s22, 2
      %s38 = sadd.s32 1, %s31
      %p39 = scmp.ge.s32.totalorder %s38, 1
      %s40 = scalar_select %p39, 0, %s38
      %s41 = sadd.s32 1, %s30
      %s42 = scalar_select %p39, %s41, %s30
      %p43 = scmp.ge.s32.totalorder %s42, 1
      %s44 = scalar_select %p43, 0, %s42
      %s45 = sadd.s32 1, %s29
      %s46 = scalar_select %p43, %s45, %s29
      %p47 = scmp.ge.s32.totalorder %s46, 2
      %s48 = scalar_select %p47, 0, %s46
      %s49 = sadd.s32 %s29, %s30
      %s50 = sadd.s32 %s48, %s44
      %s51 = ssub.s32 %s49, %s50
      %s52 = ssub.s32 %s31, %s40
      %s53 = sor.u32 %s51, %s52
      %p54 = scmp.eq.s32.totalorder %s53, 0
      %s56 = sadd.s32 %s55, 1
      %s57 = scalar_select %p54, %s55, %s56
      %p60 = pneg %p54
      %p61 = scmp.eq.s32.totalorder %s22, 1
      %p62 = por %p60, %p61
      %p63 = scmp.ne.s32.totalorder %s55, %s58
      %p64 = scmp.eq.s32.totalorder %s22, 0
      %p65 = por %p63, %p64
      %p66 = scmp.ne.s32.totalorder %s55, %s58
      %p67 = scmp.eq.s32.totalorder %s27, 1
      %p68 = por %p66, %p67
      %p69 = scmp.ne.s32.totalorder %s58, %s59
      %p70 = scmp.eq.s32.totalorder %s27, 0
      %p71 = por %p69, %p70
      %p72 = scmp.ne.s32.totalorder %s58, %s59
      %p73 = scmp.eq.s32.totalorder %s28, 1
      %p74 = por %p72, %p73
      %p76 = scmp.ne.s32.totalorder %s59, %s75
      %p77 = scmp.eq.s32.totalorder %s28, 0
      %p78 = por %p76, %p77
      %s79 = sadd.s32 %s29, %s30
      %s80 = sadd.s32 %s48, %s44
      %s81 = ssub.s32 %s79, %s80
      %s82 = ssub.s32 %s31, %s40
      %s83 = sor.u32 %s81, %s82
      %p84 = scmp.eq.s32.totalorder %s83, 0
      %s86 = sadd.s32 %s85, 1
      %s87 = scalar_select %p84, %s85, %s86
      %p90 = pneg %p84
      %p91 = scmp.eq.s32.totalorder %s22, 1
      %p92 = por %p90, %p91
      %p93 = scmp.ne.s32.totalorder %s85, %s88
      %p94 = scmp.eq.s32.totalorder %s22, 0
      %p95 = por %p93, %p94
      %p96 = scmp.ne.s32.totalorder %s85, %s88
      %p97 = scmp.eq.s32.totalorder %s27, 1
      %p98 = por %p96, %p97
      %p99 = scmp.ne.s32.totalorder %s88, %s89
      %p100 = scmp.eq.s32.totalorder %s27, 0
      %p101 = por %p99, %p100
      %p102 = scmp.ne.s32.totalorder %s88, %s89
      %p103 = scmp.eq.s32.totalorder %s28, 1
      %p104 = por %p102, %p103
      %p106 = scmp.ne.s32.totalorder %s89, %s105
      %p107 = scmp.eq.s32.totalorder %s28, 0
      %p108 = por %p106, %p107
      %s109 = ssub.s32 %s29, %s48
      %p110 = scmp.eq.s32.totalorder %s109, 0
      %s112 = sadd.s32 %s111, 1
      %s113 = scalar_select %p110, %s111, %s112
      %p116 = pneg %p110
      %p117 = scmp.eq.s32.totalorder %s22, 1
      %p118 = por %p116, %p117
      %p119 = scmp.ne.s32.totalorder %s111, %s114
      %p120 = scmp.eq.s32.totalorder %s22, 0
      %p121 = por %p119, %p120
      %p122 = scmp.ne.s32.totalorder %s111, %s114
      %p123 = scmp.eq.s32.totalorder %s27, 1
      %p124 = por %p122, %p123
      %p125 = scmp.ne.s32.totalorder %s114, %s115
      %p126 = scmp.eq.s32.totalorder %s27, 0
      %p127 = por %p125, %p126
      %p128 = scmp.ne.s32.totalorder %s114, %s115
      %p129 = scmp.eq.s32.totalorder %s28, 1
      %p130 = por %p128, %p129
      %p132 = scmp.ne.s32.totalorder %s115, %s131
      %p133 = scmp.eq.s32.totalorder %s28, 0
      %p134 = por %p132, %p133
      %s135 = ssub.s32 %s29, %s48
      %p136 = scmp.eq.s32.totalorder %s135, 0
      %s138 = sadd.s32 %s137, 1
      %s139 = scalar_select %p136, %s137, %s138
      %p142 = pneg %p136
      %p143 = scmp.eq.s32.totalorder %s22, 1
      %p144 = por %p142, %p143
      %p145 = scmp.ne.s32.totalorder %s137, %s140
      %p146 = scmp.eq.s32.totalorder %s22, 0
      %p147 = por %p145, %p146
      %p148 = scmp.ne.s32.totalorder %s137, %s140
      %p149 = scmp.eq.s32.totalorder %s27, 1
      %p150 = por %p148, %p149
      %p151 = scmp.ne.s32.totalorder %s140, %s141
      %p152 = scmp.eq.s32.totalorder %s27, 0
      %p153 = por %p151, %p152
      %p154 = scmp.ne.s32.totalorder %s140, %s141
      %p155 = scmp.eq.s32.totalorder %s28, 1
      %p156 = por %p154, %p155
      %p158 = scmp.ne.s32.totalorder %s141, %s157
      %p159 = scmp.eq.s32.totalorder %s28, 0
      %p160 = por %p158, %p159
      %p161 = scmp.le.s32.totalorder 1, %s22
      %p162 = scmp.lt.s32.totalorder %s22, 3
      %p163 = pnand %p161, %p162
      %p164 = pneg %p163
      // Predicated region
      $region9: #{tpu_custom_call.1} parent=5 // pred_check
        _
      $region10: #{tpu_custom_call.1} parent=5 // pred_check_branch
        %166 = sbr.rel (%p163) target = $region12
      $region11: #{tpu_custom_call.1} parent=5 // pred_region
        %s167 = ssub.s32 %s22, 1
      $region12: #{tpu_custom_call.1} parent=5 // pred_fallthru
        _
      %p168 = scmp.lt.s32.totalorder %s22, 2
      // Predicated region
      $region13: #{tpu_custom_call.1} parent=5 // pred_check
        %p169 = pneg %p168
      $region14: #{tpu_custom_call.1} parent=5 // pred_check_branch
        %171 = sbr.rel (%p169) target = $region16
      $region15: #{tpu_custom_call.1} parent=5 // pred_region
        // Predicated region
        $region17: #{tpu_custom_call.1} parent=15 // pred_check
          %p172 = pneg %p65
        $region18: #{tpu_custom_call.1} parent=15 // pred_check_branch
          %174 = sbr.rel (%p172) target = $region20
        $region19: #{tpu_custom_call.1} parent=15 // pred_region
          %s175 = sand.u32 %s55, 1
          %s176 = scalar_lea.sflag [#allocation3], %s175
          %s177 = sand.u32 %s55, 1
          %s178 = smul.addr %s177, 32
          %s179 = scalar_lea.vmem [#allocation2], %s178
          %s180 = sadd.s32 %s29, %s30
          %s181 = smul.u32 4, %s180
          %s183 = ssub.s32 512, 512
          %184 = vsyncadd %s176, %s183
          %s185 = sadd.s32 %s31, %s181
          %s186 = smul.addr %s185, 128
          %s187 = scalar_lea.hbm %s0, %s186
          %s188 = sshll.u32 %s179, 4
          %s189 = int_to_ptr.vmem [resolvable:$true] %s188
          %194 = dma.hbm_to_vmem [thread:$0]  %s187, 512, %s189, %s176, 128, 128, 8
        $region20: #{tpu_custom_call.1} parent=15 // pred_fallthru
          _
        // Predicated region
        $region21: #{tpu_custom_call.1} parent=15 // pred_check
          %p195 = pneg %p95
        $region22: #{tpu_custom_call.1} parent=15 // pred_check_branch
          %197 = sbr.rel (%p195) target = $region24
        $region23: #{tpu_custom_call.1} parent=15 // pred_region
          %s198 = sand.u32 %s85, 1
          %s199 = scalar_lea.sflag [#allocation6], %s198
          %s200 = sand.u32 %s85, 1
          %s201 = smul.addr %s200, 8
          %s202 = scalar_lea.vmem [#allocation5], %s201
          %s203 = sadd.s32 %s29, %s30
          %s205 = ssub.s32 128, 128
          %206 = vsyncadd %s199, %s205
          %s207 = sadd.s32 %s31, %s203
          %s208 = smul.addr %s207, 128
          %s209 = scalar_lea.hbm %s1, %s208
          %s211 = sshll.u32 %s202, 4
          %s212 = int_to_ptr.vmem [resolvable:$true] %s211
          %214 = dma.hbm_to_vmem [thread:$0]  %s209, 128, %s212, %s199
        $region24: #{tpu_custom_call.1} parent=15 // pred_fallthru
          _
      $region16: #{tpu_custom_call.1} parent=5 // pred_fallthru
        _
      %p215 = scmp.le.s32.totalorder 1, %s22
      %p216 = scmp.lt.s32.totalorder %s22, 3
      %p217 = pnand %p215, %p216
      %p218 = pneg %p217
      // Predicated region
      $region25: #{tpu_custom_call.1} parent=5 // pred_check
        _
      $region26: #{tpu_custom_call.1} parent=5 // pred_check_branch
        %220 = sbr.rel (%p217) target = $region28
      $region27: #{tpu_custom_call.1} parent=5 // pred_region
        %s221 = ssub.s32 %s22, 1
        %s222 = sand.u32 %s58, 1
        %s223 = scalar_lea.sflag [#allocation3], %s222
        %s224 = sand.u32 %s58, 1
        %s225 = smul.addr %s224, 32
        %s226 = scalar_lea.vmem [#allocation2], %s225
        // Predicated region
        $region29: #{tpu_custom_call.1} parent=27 // pred_check
          %p227 = pneg %p71
        $region30: #{tpu_custom_call.1} parent=27 // pred_check_branch
          %229 = sbr.rel (%p227) target = $region32
        $region31: #{tpu_custom_call.1} parent=27 // pred_region
          %230 = dma.done %s223, 512
        $region32: #{tpu_custom_call.1} parent=27 // pred_fallthru
          _
        %s231 = sand.u32 %s88, 1
        %s232 = scalar_lea.sflag [#allocation6], %s231
        %s233 = sand.u32 %s88, 1
        %s234 = smul.addr %s233, 8
        %s235 = scalar_lea.vmem [#allocation5], %s234
        // Predicated region
        $region33: #{tpu_custom_call.1} parent=27 // pred_check
          %p236 = pneg %p101
        $region34: #{tpu_custom_call.1} parent=27 // pred_check_branch
          %238 = sbr.rel (%p236) target = $region36
        $region35: #{tpu_custom_call.1} parent=27 // pred_region
          %239 = dma.done %s232, 128
        $region36: #{tpu_custom_call.1} parent=27 // pred_fallthru
          _
        %s240 = sand.u32 %s58, 1
        %s241 = scalar_lea.sflag [#allocation3], %s240
        %s242 = sand.u32 %s58, 1
        %s243 = smul.addr %s242, 32
        %s244 = scalar_lea.vmem [#allocation2], %s243
        %p245 = pneg %p71
        %p246 = pneg %p68
        %s247 = sand.u32 %s88, 1
        %s248 = scalar_lea.sflag [#allocation6], %s247
        %s249 = sand.u32 %s88, 1
        %s250 = smul.addr %s249, 8
        %s251 = scalar_lea.vmem [#allocation5], %s250
        %p252 = pneg %p101
        %p253 = pneg %p98
        %p254 = pneg %p127
        %p255 = pneg %p124
        %s256 = sand.u32 %s114, 1
        %s257 = scalar_lea.sflag [#allocation4], %s256
        %s258 = sand.u32 %s114, 1
        %s259 = smul.addr %s258, 8
        %s260 = scalar_lea.vmem [#allocation7], %s259
        %p261 = pneg %p153
        %p262 = pneg %p150
        %s263 = sand.u32 %s140, 1
        %s264 = scalar_lea.sflag [#allocation9], %s263
        %s265 = sand.u32 %s140, 1
        %s266 = smul.addr %s265, 8
        %s267 = scalar_lea.vmem [#allocation8], %s266
        %s268 = sadd.s32 %s32, %s33
        %s269 = smul.u32 4, %s268
        %s270 = sadd.s32 %s32, %s33
        %p273 = scmp.eq.s32.totalorder %s33, 0
        %p274 = scmp.eq.s32.totalorder %s34, 0
        %p275 = pnand %p273, %p274
        %p276 = pneg %p275
        // Predicated region
        $region37: #{tpu_custom_call.1} parent=27 // pred_check
          _
        $region38: #{tpu_custom_call.1} parent=27 // pred_check_branch
          %278 = sbr.rel (%p275) target = $region40
        $region39: #{tpu_custom_call.1} parent=27 // pred_region
          %279 = vst [vmem:[%s260] sm:$0xff] 0.0
          %280 = vst [vmem:[%s267] sm:$0xff] 0.0
        $region40: #{tpu_custom_call.1} parent=27 // pred_fallthru
          _
        %v281 = vld [vmem:[%s226] sm:$0xff]
        %v282 = vld [vmem:[%s226 + $0x8] sm:$0xff]
        %v283 = vld [vmem:[%s226 + $0x10] sm:$0xff]
        %v284 = vld [vmem:[%s226 + $0x18] sm:$0xff]
        %v285 = vld [vmem:[%s235] sm:$0xff]
        %v286 = vmul.f32 %v281, 7.0
        %v287 = vmul.f32 %v282, 7.0
        %v288 = vmul.f32 %v283, 7.0
        %v289 = vmul.f32 %v284, 7.0
        %v290 = vmul.f32 %v286, 1.442695
        %v291 = vpow.pop %v290
        %v292 = vmul.f32 %v287, 1.442695
        %v293 = vpow.pop %v292
        %v294 = vmul.f32 %v288, 1.442695
        %v295 = vpow.pop %v294
        %v296 = vmul.f32 %v289, 1.442695
        %v297 = vpow.pop %v296
        %vm298 = vnez %v285
        %v299 = vsel %vm298, 16843009, 0
        %v300 = vunpack.c.0.s8 %v299
        %v301 = vunpack.c.1.s8 %v299
        %v302 = vunpack.c.2.s8 %v299
        %v303 = vunpack.c.3.s8 %v299
        %v304 = vpack.c.b16 %v300, %v300
        %v305 = vpack.c.b8 %v304, %v304
        %v306 = vpack.c.b16 %v301, %v301
        %v307 = vpack.c.b8 %v306, %v306
        %v308 = vpack.c.b16 %v302, %v302
        %v309 = vpack.c.b8 %v308, %v308
        %v310 = vpack.c.b16 %v303, %v303
        %v311 = vpack.c.b8 %v310, %v310
        %vm312 = vnez %v305
        %vm313 = vnez %v307
        %vm314 = vnez %v309
        %vm315 = vnez %v311
        %v316 = vsel %vm312, 16843009, 0
        %v317 = vsel %vm313, 16843009, 0
        %v318 = vsel %vm314, 16843009, 0
        %v319 = vsel %vm315, 16843009, 0
        %v320 = vunpack.c.0.s8 %v316
        %v321 = vunpack.c.0.s8 %v317
        %v322 = vunpack.c.0.s8 %v318
        %v323 = vunpack.c.0.s8 %v319
        %vm324 = vcmp.ne.s32.totalorder %v320, 0
        %vm325 = vcmp.ne.s32.totalorder %v321, 0
        %vm326 = vcmp.ne.s32.totalorder %v322, 0
        %vm327 = vcmp.ne.s32.totalorder %v323, 0
        %v328 = vsel %vm324, %v291, 0.0
        %v329 = vsel %vm325, %v293, 0.0
        %v330 = vsel %vm326, %v295, 0.0
        %v331 = vsel %vm327, %v297, 0.0
        %v332 = vld [vmem:[%s267] sm:$0xff]
        %v333 = vadd.f32 %v291, %v293
        %v334 = vadd.f32 %v333, %v295
        %v335 = vadd.f32 %v334, %v297
        %v336 = vadd.f32 %v332, %v335
        %337 = vst [vmem:[%s267] sm:$0xff] %v336
        %v338 = vld [vmem:[%s260] sm:$0xff]
        %v339 = vadd.f32 %v328, %v329
        %v340 = vadd.f32 %v339, %v330
        %v341 = vadd.f32 %v340, %v331
        %v342 = vadd.f32 %v338, %v341
        %343 = vst [vmem:[%s260] sm:$0xff] %v342
        %s344 = sand.u32 %s114, 1
        %s345 = scalar_lea.sflag [#allocation4], %s344
        %s346 = sand.u32 %s114, 1
        %s347 = smul.addr %s346, 8
        %s348 = scalar_lea.vmem [#allocation7], %s347
        %s349 = sand.u32 %s140, 1
        %s350 = scalar_lea.sflag [#allocation9], %s349
        %s351 = sand.u32 %s140, 1
        %s352 = smul.addr %s351, 8
        %s353 = scalar_lea.vmem [#allocation8], %s352
        // Predicated region
        $region41: #{tpu_custom_call.1} parent=27 // pred_check
          %p354 = pneg %p124
        $region42: #{tpu_custom_call.1} parent=27 // pred_check_branch
          %356 = sbr.rel (%p354) target = $region44
        $region43: #{tpu_custom_call.1} parent=27 // pred_region
          %s358 = ssub.s32 128, 128
          %359 = vsyncadd %s345, %s358
          %s360 = smul.addr %s32, 128
          %s361 = scalar_lea.hbm %s2, %s360
          %s363 = sshll.u32 %s348, 4
          %s364 = int_to_ptr.vmem [resolvable:$true] %s363
          %366 = dma.vmem_to_hbm [thread:$0]  %s364, 128, %s361, %s345
        $region44: #{tpu_custom_call.1} parent=27 // pred_fallthru
          _
        // Predicated region
        $region45: #{tpu_custom_call.1} parent=27 // pred_check
          %p367 = pneg %p150
        $region46: #{tpu_custom_call.1} parent=27 // pred_check_branch
          %369 = sbr.rel (%p367) target = $region48
        $region47: #{tpu_custom_call.1} parent=27 // pred_region
          %s371 = ssub.s32 128, 128
          %372 = vsyncadd %s350, %s371
          %s373 = smul.addr %s32, 128
          %s374 = scalar_lea.hbm %s3, %s373
          %s376 = sshll.u32 %s353, 4
          %s377 = int_to_ptr.vmem [resolvable:$true] %s376
          %379 = dma.vmem_to_hbm [thread:$0]  %s377, 128, %s374, %s350
        $region48: #{tpu_custom_call.1} parent=27 // pred_fallthru
          _
      $region28: #{tpu_custom_call.1} parent=5 // pred_fallthru
        _
      %p380 = scmp.le.s32.totalorder 2, %s22
      // Predicated region
      $region49: #{tpu_custom_call.1} parent=5 // pred_check
        %p381 = pneg %p380
      $region50: #{tpu_custom_call.1} parent=5 // pred_check_branch
        %383 = sbr.rel (%p381) target = $region52
      $region51: #{tpu_custom_call.1} parent=5 // pred_region
        %s384 = ssub.s32 %s22, 2
        // Predicated region
        $region53: #{tpu_custom_call.1} parent=51 // pred_check
          %p385 = pneg %p130
        $region54: #{tpu_custom_call.1} parent=51 // pred_check_branch
          %387 = sbr.rel (%p385) target = $region56
        $region55: #{tpu_custom_call.1} parent=51 // pred_region
          %s388 = sand.u32 %s115, 1
          %s389 = scalar_lea.sflag [#allocation4], %s388
          %s390 = sand.u32 %s115, 1
          %s391 = smul.addr %s390, 8
          %s392 = scalar_lea.vmem [#allocation7], %s391
          %393 = dma.done %s389, 128
        $region56: #{tpu_custom_call.1} parent=51 // pred_fallthru
          _
        // Predicated region
        $region57: #{tpu_custom_call.1} parent=51 // pred_check
          %p394 = pneg %p156
        $region58: #{tpu_custom_call.1} parent=51 // pred_check_branch
          %396 = sbr.rel (%p394) target = $region60
        $region59: #{tpu_custom_call.1} parent=51 // pred_region
          %s397 = sand.u32 %s141, 1
          %s398 = scalar_lea.sflag [#allocation9], %s397
          %s399 = sand.u32 %s141, 1
          %s400 = smul.addr %s399, 8
          %s401 = scalar_lea.vmem [#allocation8], %s400
          %402 = dma.done %s398, 128
        $region60: #{tpu_custom_call.1} parent=51 // pred_fallthru
          _
      $region52: #{tpu_custom_call.1} parent=5 // pred_fallthru
        _
    $region6: #{tpu_custom_call.1} parent=1 // loop_footer
      %s26 = sadd.s32 1, %s22
    $region7: #{tpu_custom_call.1} parent=1 // loop_footer_branch
      %21 = sbr.rel target = $region3
    $region8: #{tpu_custom_call.1} parent=1 // loop_exit
      _
    %403 = vsyncpa [#allocation3], 1
    %s404 = scalar_lea.sflag [#allocation3], 1
    %405 = vsyncpa %s404, 1
    %406 = vsyncpa [#allocation6], 1
    %s407 = scalar_lea.sflag [#allocation6], 1
    %408 = vsyncpa %s407, 1
    %409 = vsyncpa [#allocation4], 1
    %s410 = scalar_lea.sflag [#allocation4], 1
    %411 = vsyncpa %s410, 1
    %412 = vsyncpa [#allocation9], 1
    %s413 = scalar_lea.sflag [#allocation9], 1
    %414 = vsyncpa %s413, 1

</llo_original>
